<compile_context>
chip_gen: v7x
topology: tpu7x:2x2x1
jax: 0.10.0
libtpu: 0.0.40
codegen_flags: <defaults>
</compile_context>

<pallas_src>
import numpy as np
import jax
import jax.numpy as jnp
from jax.experimental import pallas as pl
from jax.experimental.pallas import tpu as pltpu


def _make_kernel(c_outs):
    """Build a kernel for K branches.

    Kernel refs (in order):
      x_0..x_{K-1}  : (C_i, thw)   activations, H*W on lanes (batch dim squeezed)
      w_0..w_{K-1}  : (O_i, C_i)   transposed 1x1-conv weights (VMEM-resident)
      b_0..b_{K-1}  : (O_i, 1)     biases (VMEM-resident)
      o             : (O_total, thw) channel-concatenated output tile
    """
    K = len(c_outs)
    row_off = [0]
    for o in c_outs:
        row_off.append(row_off[-1] + o)

    def kernel(*refs):
        x_refs = refs[0:K]
        w_refs = refs[K:2 * K]
        b_refs = refs[2 * K:3 * K]
        o_ref = refs[3 * K]
        for i in range(K):
            y = jnp.dot(w_refs[i][...], x_refs[i][...],
                        preferred_element_type=jnp.float32)
            y = y + b_refs[i][...]
            o_ref[row_off[i]:row_off[i + 1], :] = y.astype(o_ref.dtype)

    return kernel


def _vmem_capacity_bytes():
    try:
        info = pltpu.get_tpu_info()
        return int(getattr(info, "vmem_capacity_bytes", 64 << 20))
    except Exception:
        return 64 << 20  # conservative: v7x per-TC physical VMEM


def apply_and_cat(xs_nchw, params, *, target_step_bytes=4 << 20):
    """Fused ApplyAndCat for 1x1-conv submodules.

    xs_nchw : list of NCHW arrays (one per sub-module).
    params  : list of (w, b); w has shape (C_in_i, C_out_i), b has shape
              (1, C_out_i).  NOTE: PyTorch Conv2d stores weight as
              (C_out, C_in, 1, 1) -> import as w = weight[:, :, 0, 0].T.
    Returns NCHW output with channels = sum_i C_out_i (PyTorch cat on dim=1).
    """
    K = len(xs_nchw)
    assert K == len(params), f"{K} xs and {len(params)} modules"

    N, _, H, W = xs_nchw[0].shape
    HW = H * W
    c_ins = [int(x.shape[1]) for x in xs_nchw]
    c_outs = [int(w.shape[1]) for (w, _) in params]
    for x, (w, b), ci, oi in zip(xs_nchw, params, c_ins, c_outs):
        assert x.shape[0] == N and x.shape[2] == H and x.shape[3] == W, x.shape
        # Guard the weight orientation contract explicitly.
        assert w.shape == (ci, oi), (
            f"weight must be (C_in={ci}, C_out), got {w.shape}; "
            "PyTorch Conv2d stores (C_out, C_in, 1, 1) -> pass w[:, :, 0, 0].T")
        assert b.shape == (1, oi), b.shape
    C_total = sum(c_ins)
    O_total = sum(c_outs)
    out_dtype = xs_nchw[0].dtype

    # Zero-cost views: NCHW (contiguous) -> (N, C_i, H*W).
    xs_flat = [x.reshape(N, ci, HW) for x, ci in zip(xs_nchw, c_ins)]
    # Tiny trace-time prep of the resident operands (no block-diag assembly).
    wTs = [jnp.asarray(w, jnp.float32).T for (w, _) in params]            # (O_i, C_i)
    bcols = [jnp.asarray(b, jnp.float32).reshape(oi, 1)
             for (_, b), oi in zip(params, c_outs)]                        # (O_i, 1)

    # --- lane-tile selection along H*W -------------------------------------
    itemsize = max(jnp.dtype(out_dtype).itemsize, 4)
    per_col_bytes = (C_total + O_total) * itemsize
    vmem_phys = _vmem_capacity_bytes()
    pipeline_budget = vmem_phys // 3          # leave room for internal scratch

    if HW <= 256:
        thw = HW                              # single full block (always legal)
    else:
        thw = min(target_step_bytes // per_col_bytes,      # amortize step cost
                  pipeline_budget // (2 * per_col_bytes),  # double-buffered fit
                  HW)
        thw = max(128, (thw // 128) * 128)
        if thw >= HW:
            thw = HW                          # full-dim block, no tail handling
    n_hw = pl.cdiv(HW, thw)                   # partial trailing block is fine
    grid = (N, n_hw)

    resident_bytes = sum(o * c + o for o, c in zip(c_outs, c_ins)) * 4
    step_bytes = per_col_bytes * thw
    vmem_limit = 2 * step_bytes + 2 * resident_bytes + (4 << 20)
    vmem_limit = int(min(max(vmem_limit, 16 << 20), vmem_phys // 2))

    # --- specs --------------------------------------------------------------
    in_specs = []
    for ci in c_ins:       # activations: new HW tile each step, HW on lanes
        in_specs.append(
            pl.BlockSpec((pl.Squeezed(), ci, thw), lambda n, j: (n, 0, j)))
    for oi, ci in zip(c_outs, c_ins):   # weights: constant index -> resident
        in_specs.append(pl.BlockSpec((oi, ci), lambda n, j: (0, 0)))
    for oi in c_outs:                   # biases: resident
        in_specs.append(pl.BlockSpec((oi, 1), lambda n, j: (0, 0)))
    out_spec = pl.BlockSpec((pl.Squeezed(), O_total, thw), lambda n, j: (n, 0, j))

    out_flat = pl.pallas_call(
        _make_kernel(c_outs),
        out_shape=jax.ShapeDtypeStruct((N, O_total, HW), out_dtype),
        grid_spec=pltpu.PrefetchScalarGridSpec(
            num_scalar_prefetch=0,
            grid=grid,
            in_specs=in_specs,
            out_specs=out_spec,
        ),
        compiler_params=pltpu.CompilerParams(
            dimension_semantics=("parallel", "parallel"),
            vmem_limit_bytes=vmem_limit,
        ),
    )(*xs_flat, *wTs, *bcols)

    # Zero-cost view back to NCHW (channels already concatenated in-kernel).
    return out_flat.reshape(N, O_total, H, W)


def _reference(xs_nchw, params):
    """Pure-JAX reference matching PyTorch ApplyAndCat with 1x1 Conv2d modules."""
    ys = []
    for x, (w, b) in zip(xs_nchw, params):
        y = jnp.einsum("nchw,co->nohw", x, w) + b[0][None, :, None, None]
        ys.append(y)
    return jnp.concatenate(ys, axis=1)


if __name__ == "__main__":
    key = jax.random.PRNGKey(0)
    k1, k2, k3, k4, k5, k6 = jax.random.split(key, 6)

    # Two NCHW inputs, one per sub-module (1x1 convs).
    N, H, W = 2, 16, 16
    C1, O1 = 4, 8      # module 0: Conv2d(4, 8, kernel_size=1)
    C2, O2 = 6, 12     # module 1: Conv2d(6, 12, kernel_size=1)

    x1 = jax.random.normal(k1, (N, C1, H, W), dtype=jnp.float32)
    x2 = jax.random.normal(k2, (N, C2, H, W), dtype=jnp.float32)

    w1 = jax.random.normal(k3, (C1, O1), dtype=jnp.float32) * 0.1
    b1 = jax.random.normal(k4, (1, O1), dtype=jnp.float32) * 0.1
    w2 = jax.random.normal(k5, (C2, O2), dtype=jnp.float32) * 0.1
    b2 = jax.random.normal(k6, (1, O2), dtype=jnp.float32) * 0.1

    xs = [x1, x2]
    params = [(w1, b1), (w2, b2)]

    out = apply_and_cat(xs, params)
    out = jax.block_until_ready(out)

    ref = _reference(xs, params)
    assert out.shape == (N, O1 + O2, H, W), out.shape
    np.testing.assert_allclose(np.asarray(out), np.asarray(ref), rtol=1e-5, atol=1e-5)

    print("KERNEL_OK")
</pallas_src>

<mosaic_0001>
module attributes {stable_mosaic.version = 11 : i64} {
  func.func @kernel(%arg0: i32, %arg1: i32, %arg2: memref<1x4x256xf32, #tpu.memory_space<vmem>>, %arg3: memref<1x6x256xf32, #tpu.memory_space<vmem>>, %arg4: memref<8x4xf32, #tpu.memory_space<vmem>>, %arg5: memref<12x6xf32, #tpu.memory_space<vmem>>, %arg6: memref<8x1xf32, #tpu.memory_space<vmem>>, %arg7: memref<12x1xf32, #tpu.memory_space<vmem>>, %arg8: memref<1x20x256xf32, #tpu.memory_space<vmem>>) attributes {dimension_semantics = [#tpu.dimension_semantics<parallel>, #tpu.dimension_semantics<parallel>], iteration_bounds = array<i64: 2, 1>, scalar_prefetch = 0 : i64, scratch_operands = 0 : i64, tpu.core_type = #tpu.core_type<tc>, window_params = [{transform_indices = @transform_0, window_bounds = array<i64: 1, 4, 256>}, {transform_indices = @transform_1, window_bounds = array<i64: 1, 6, 256>}, {pipeline_mode = #tpu.pipeline_mode<synchronous>, transform_indices = @transform_2, window_bounds = array<i64: 8, 4>}, {pipeline_mode = #tpu.pipeline_mode<synchronous>, transform_indices = @transform_3, window_bounds = array<i64: 12, 6>}, {pipeline_mode = #tpu.pipeline_mode<synchronous>, transform_indices = @transform_4, window_bounds = array<i64: 8, 1>}, {pipeline_mode = #tpu.pipeline_mode<synchronous>, transform_indices = @transform_5, window_bounds = array<i64: 12, 1>}, {transform_indices = @transform_6, window_bounds = array<i64: 1, 20, 256>}]} {
    %c0 = arith.constant 0 : index
    %c0_0 = arith.constant 0 : index
    %0 = vector.load %arg4[%c0, %c0_0] : memref<8x4xf32, #tpu.memory_space<vmem>>, vector<8x4xf32>
    %c0_1 = arith.constant 0 : index
    %c0_2 = arith.constant 0 : index
    %c0_3 = arith.constant 0 : index
    %1 = vector.load %arg2[%c0_1, %c0_2, %c0_3] : memref<1x4x256xf32, #tpu.memory_space<vmem>>, vector<1x4x256xf32>
    %2 = vector.shape_cast %1 : vector<1x4x256xf32> to vector<4x256xf32>
    %cst = arith.constant dense<0.000000e+00> : vector<8x256xf32>
    %3 = tpu.matmul %0, %2, %cst {dimension_numbers = #tpu.dot_dimension_numbers<[1], [0], [0], [1], [0, 0, 1, 1], [], []>} : vector<8x4xf32>, vector<4x256xf32>, vector<8x256xf32> -> vector<8x256xf32>
    %c0_4 = arith.constant 0 : index
    %c0_5 = arith.constant 0 : index
    %4 = vector.load %arg6[%c0_4, %c0_5] : memref<8x1xf32, #tpu.memory_space<vmem>>, vector<8x1xf32>
    %5 = vector.broadcast %4 : vector<8x1xf32> to vector<8x256xf32>
    %6 = arith.addf %3, %5 : vector<8x256xf32>
    %c0_6 = arith.constant 0 : index
    %c0_7 = arith.constant 0 : index
    %c0_8 = arith.constant 0 : index
    %7 = vector.load %arg8[%c0_6, %c0_7, %c0_8] : memref<1x20x256xf32, #tpu.memory_space<vmem>>, vector<1x8x256xf32>
    %8 = vector.shape_cast %7 : vector<1x8x256xf32> to vector<8x256xf32>
    %9 = vector.shape_cast %6 : vector<8x256xf32> to vector<1x8x256xf32>
    tpu.vector_store %arg8[%c0_6, %c0_7, %c0_8], %9 {strides = array<i32>} : memref<1x20x256xf32, #tpu.memory_space<vmem>>, vector<1x8x256xf32>,
    %c0_9 = arith.constant 0 : index
    %c0_10 = arith.constant 0 : index
    %10 = vector.load %arg5[%c0_9, %c0_10] : memref<12x6xf32, #tpu.memory_space<vmem>>, vector<12x6xf32>
    %c0_11 = arith.constant 0 : index
    %c0_12 = arith.constant 0 : index
    %c0_13 = arith.constant 0 : index
    %11 = vector.load %arg3[%c0_11, %c0_12, %c0_13] : memref<1x6x256xf32, #tpu.memory_space<vmem>>, vector<1x6x256xf32>
    %12 = vector.shape_cast %11 : vector<1x6x256xf32> to vector<6x256xf32>
    %cst_14 = arith.constant dense<0.000000e+00> : vector<12x256xf32>
    %13 = tpu.matmul %10, %12, %cst_14 {dimension_numbers = #tpu.dot_dimension_numbers<[1], [0], [0], [1], [0, 0, 1, 1], [], []>} : vector<12x6xf32>, vector<6x256xf32>, vector<12x256xf32> -> vector<12x256xf32>
    %c0_15 = arith.constant 0 : index
    %c0_16 = arith.constant 0 : index
    %14 = vector.load %arg7[%c0_15, %c0_16] : memref<12x1xf32, #tpu.memory_space<vmem>>, vector<12x1xf32>
    %15 = vector.broadcast %14 : vector<12x1xf32> to vector<12x256xf32>
    %16 = arith.addf %13, %15 : vector<12x256xf32>
    %c0_17 = arith.constant 0 : index
    %c8 = arith.constant 8 : index
    %c0_18 = arith.constant 0 : index
    %17 = vector.load %arg8[%c0_17, %c8, %c0_18] : memref<1x20x256xf32, #tpu.memory_space<vmem>>, vector<1x12x256xf32>
    %18 = vector.shape_cast %17 : vector<1x12x256xf32> to vector<12x256xf32>
    %19 = vector.shape_cast %16 : vector<12x256xf32> to vector<1x12x256xf32>
    tpu.vector_store %arg8[%c0_17, %c8, %c0_18], %19 {strides = array<i32>} : memref<1x20x256xf32, #tpu.memory_space<vmem>>, vector<1x12x256xf32>,
    return
  }
  func.func @transform_0(%arg0: i32, %arg1: i32) -> (i32, i32, i32) {
    %c0_i32 = arith.constant 0 : i32
    %c0_i32_0 = arith.constant 0 : i32
    return %arg0, %c0_i32, %arg1 : i32, i32, i32
  }
  func.func @transform_1(%arg0: i32, %arg1: i32) -> (i32, i32, i32) {
    %c0_i32 = arith.constant 0 : i32
    %c0_i32_0 = arith.constant 0 : i32
    return %arg0, %c0_i32, %arg1 : i32, i32, i32
  }
  func.func @transform_2(%arg0: i32, %arg1: i32) -> (i32, i32) {
    %c0_i32 = arith.constant 0 : i32
    %c0_i32_0 = arith.constant 0 : i32
    %c0_i32_1 = arith.constant 0 : i32
    return %c0_i32, %c0_i32_0 : i32, i32
  }
  func.func @transform_3(%arg0: i32, %arg1: i32) -> (i32, i32) {
    %c0_i32 = arith.constant 0 : i32
    %c0_i32_0 = arith.constant 0 : i32
    %c0_i32_1 = arith.constant 0 : i32
    return %c0_i32, %c0_i32_0 : i32, i32
  }
  func.func @transform_4(%arg0: i32, %arg1: i32) -> (i32, i32) {
    %c0_i32 = arith.constant 0 : i32
    %c0_i32_0 = arith.constant 0 : i32
    %c0_i32_1 = arith.constant 0 : i32
    return %c0_i32, %c0_i32_0 : i32, i32
  }
  func.func @transform_5(%arg0: i32, %arg1: i32) -> (i32, i32) {
    %c0_i32 = arith.constant 0 : i32
    %c0_i32_0 = arith.constant 0 : i32
    %c0_i32_1 = arith.constant 0 : i32
    return %c0_i32, %c0_i32_0 : i32, i32
  }
  func.func @transform_6(%arg0: i32, %arg1: i32) -> (i32, i32, i32) {
    %c0_i32 = arith.constant 0 : i32
    %c0_i32_0 = arith.constant 0 : i32
    return %arg0, %c0_i32, %arg1 : i32, i32, i32
  }
}

</mosaic_0001>

<llo_original>
// kernel: tpu_custom_call.1
$region0: #{tpu_custom_call.1}
  #allocation0 [shape = 'u32[]', space=smem, size = 0x4, offset = 0x4, fixed_abs, tag = 'smem constant byte address 0x4 - core index']
  #allocation1 [shape = 'u32[144,128]{1,0:T(1,128)}', space=vmem, size = 0x12000, scoped, tag = 'internal scratch']
  %s0 = inlined_call_operand.vmem [shape: f32[2,4,256], index: 0, kind: input, shape index: {}]
  %s1 = inlined_call_operand.vmem [shape: f32[2,6,256], index: 1, kind: input, shape index: {}]
  %s2 = inlined_call_operand.vmem [shape: f32[8,4], index: 2, kind: input, shape index: {}]
  %s3 = inlined_call_operand.vmem [shape: f32[12,6], index: 3, kind: input, shape index: {}]
  %s4 = inlined_call_operand.vmem [shape: f32[8,1], index: 4, kind: input, shape index: {}]
  %s5 = inlined_call_operand.vmem [shape: f32[12,1], index: 5, kind: input, shape index: {}]
  %s6 = inlined_call_operand.vmem [shape: f32[2,20,256], index: 6, kind: output, shape index: {}]
  %s7 = sld [smem:[#allocation0]]
  $region57: #{tpu_custom_call.1} parent=0
    _
  %s9 = ssub.s32 1, %s7
  %s10 = scalar_select 0, %s9, %s7
  loop: start=0, step=1, limit=4
  $region2: #{tpu_custom_call.1} parent=0 // loop_pre_header
    _
  $region3: #{tpu_custom_call.1} parent=0 // loop_header
    %s12 = sphi 0, %s16
    %p13 = scmp.ge.s32.totalorder %s12, 4
    %s19 = sphi 0, %s31
    %s20 = sphi 0, %s27
    %s21 = sphi 0, %s19
    %s22 = sphi 0, %s20
    %s23 = sphi 0, %s21
    %s24 = sphi 0, %s22
    %s36 = sphi 0, %s38
    %s39 = sphi 0, %s36
    %s40 = sphi 0, %s39
    %s56 = sphi 0, %s40
    %s64 = sphi 0, %s66
    %s67 = sphi 0, %s64
    %s68 = sphi 0, %s67
    %s84 = sphi 0, %s68
    %s88 = sphi 0, %s88
    %s90 = sphi 0, %s88
    %s91 = sphi 0, %s90
    %s105 = sphi 0, %s91
    %s109 = sphi 0, %s109
    %s111 = sphi 0, %s109
    %s112 = sphi 0, %s111
    %s126 = sphi 0, %s112
    %s130 = sphi 0, %s130
    %s132 = sphi 0, %s130
    %s133 = sphi 0, %s132
    %s147 = sphi 0, %s133
    %s151 = sphi 0, %s151
    %s153 = sphi 0, %s151
    %s154 = sphi 0, %s153
    %s168 = sphi 0, %s154
    %s176 = sphi 0, %s178
    %s179 = sphi 0, %s176
    %s180 = sphi 0, %s179
    %s196 = sphi 0, %s180
  $region4: #{tpu_custom_call.1} parent=0 // loop_header_branch
    %15 = sbr.rel (%p13) target = $region8
  $region5: #{tpu_custom_call.1} parent=0 // loop_body
    %s17 = ssub.s32 %s12, 1
    %s18 = ssub.s32 %s12, 2
    %s25 = sadd.s32 1, %s20
    %p26 = scmp.ge.s32.totalorder %s25, 1
    %s27 = scalar_select %p26, 0, %s25
    %s28 = sadd.s32 1, %s19
    %s29 = scalar_select %p26, %s28, %s19
    %p30 = scmp.ge.s32.totalorder %s29, 2
    %s31 = scalar_select %p30, 0, %s29
    %s32 = ssub.s32 %s19, %s31
    %s33 = ssub.s32 %s20, %s27
    %s34 = sor.u32 %s32, %s33
    %p35 = scmp.eq.s32.totalorder %s34, 0
    %s37 = sadd.s32 %s36, 1
    %s38 = scalar_select %p35, %s36, %s37
    %p41 = pneg %p35
    %p42 = scmp.eq.s32.totalorder %s12, 1
    %p43 = por %p41, %p42
    %p44 = scmp.ne.s32.totalorder %s36, %s39
    %p45 = scmp.eq.s32.totalorder %s12, 0
    %p46 = por %p44, %p45
    %p47 = scmp.ne.s32.totalorder %s36, %s39
    %p48 = scmp.eq.s32.totalorder %s17, 1
    %p49 = por %p47, %p48
    %p50 = scmp.ne.s32.totalorder %s39, %s40
    %p51 = scmp.eq.s32.totalorder %s17, 0
    %p52 = por %p50, %p51
    %p53 = scmp.ne.s32.totalorder %s39, %s40
    %p54 = scmp.eq.s32.totalorder %s18, 1
    %p55 = por %p53, %p54
    %p57 = scmp.ne.s32.totalorder %s40, %s56
    %p58 = scmp.eq.s32.totalorder %s18, 0
    %p59 = por %p57, %p58
    %s60 = ssub.s32 %s19, %s31
    %s61 = ssub.s32 %s20, %s27
    %s62 = sor.u32 %s60, %s61
    %p63 = scmp.eq.s32.totalorder %s62, 0
    %s65 = sadd.s32 %s64, 1
    %s66 = scalar_select %p63, %s64, %s65
    %p69 = pneg %p63
    %p70 = scmp.eq.s32.totalorder %s12, 1
    %p71 = por %p69, %p70
    %p72 = scmp.ne.s32.totalorder %s64, %s67
    %p73 = scmp.eq.s32.totalorder %s12, 0
    %p74 = por %p72, %p73
    %p75 = scmp.ne.s32.totalorder %s64, %s67
    %p76 = scmp.eq.s32.totalorder %s17, 1
    %p77 = por %p75, %p76
    %p78 = scmp.ne.s32.totalorder %s67, %s68
    %p79 = scmp.eq.s32.totalorder %s17, 0
    %p80 = por %p78, %p79
    %p81 = scmp.ne.s32.totalorder %s67, %s68
    %p82 = scmp.eq.s32.totalorder %s18, 1
    %p83 = por %p81, %p82
    %p85 = scmp.ne.s32.totalorder %s68, %s84
    %p86 = scmp.eq.s32.totalorder %s18, 0
    %p87 = por %p85, %p86
    %s89 = sadd.s32 %s88, 1
    %p92 = scmp.eq.s32.totalorder %s12, 1
    %p93 = scmp.ne.s32.totalorder %s88, %s90
    %p94 = scmp.eq.s32.totalorder %s12, 0
    %p95 = por %p93, %p94
    %p96 = scmp.ne.s32.totalorder %s88, %s90
    %p97 = scmp.eq.s32.totalorder %s17, 1
    %p98 = por %p96, %p97
    %p99 = scmp.ne.s32.totalorder %s90, %s91
    %p100 = scmp.eq.s32.totalorder %s17, 0
    %p101 = por %p99, %p100
    %p102 = scmp.ne.s32.totalorder %s90, %s91
    %p103 = scmp.eq.s32.totalorder %s18, 1
    %p104 = por %p102, %p103
    %p106 = scmp.ne.s32.totalorder %s91, %s105
    %p107 = scmp.eq.s32.totalorder %s18, 0
    %p108 = por %p106, %p107
    %s110 = sadd.s32 %s109, 1
    %p113 = scmp.eq.s32.totalorder %s12, 1
    %p114 = scmp.ne.s32.totalorder %s109, %s111
    %p115 = scmp.eq.s32.totalorder %s12, 0
    %p116 = por %p114, %p115
    %p117 = scmp.ne.s32.totalorder %s109, %s111
    %p118 = scmp.eq.s32.totalorder %s17, 1
    %p119 = por %p117, %p118
    %p120 = scmp.ne.s32.totalorder %s111, %s112
    %p121 = scmp.eq.s32.totalorder %s17, 0
    %p122 = por %p120, %p121
    %p123 = scmp.ne.s32.totalorder %s111, %s112
    %p124 = scmp.eq.s32.totalorder %s18, 1
    %p125 = por %p123, %p124
    %p127 = scmp.ne.s32.totalorder %s112, %s126
    %p128 = scmp.eq.s32.totalorder %s18, 0
    %p129 = por %p127, %p128
    %s131 = sadd.s32 %s130, 1
    %p134 = scmp.eq.s32.totalorder %s12, 1
    %p135 = scmp.ne.s32.totalorder %s130, %s132
    %p136 = scmp.eq.s32.totalorder %s12, 0
    %p137 = por %p135, %p136
    %p138 = scmp.ne.s32.totalorder %s130, %s132
    %p139 = scmp.eq.s32.totalorder %s17, 1
    %p140 = por %p138, %p139
    %p141 = scmp.ne.s32.totalorder %s132, %s133
    %p142 = scmp.eq.s32.totalorder %s17, 0
    %p143 = por %p141, %p142
    %p144 = scmp.ne.s32.totalorder %s132, %s133
    %p145 = scmp.eq.s32.totalorder %s18, 1
    %p146 = por %p144, %p145
    %p148 = scmp.ne.s32.totalorder %s133, %s147
    %p149 = scmp.eq.s32.totalorder %s18, 0
    %p150 = por %p148, %p149
    %s152 = sadd.s32 %s151, 1
    %p155 = scmp.eq.s32.totalorder %s12, 1
    %p156 = scmp.ne.s32.totalorder %s151, %s153
    %p157 = scmp.eq.s32.totalorder %s12, 0
    %p158 = por %p156, %p157
    %p159 = scmp.ne.s32.totalorder %s151, %s153
    %p160 = scmp.eq.s32.totalorder %s17, 1
    %p161 = por %p159, %p160
    %p162 = scmp.ne.s32.totalorder %s153, %s154
    %p163 = scmp.eq.s32.totalorder %s17, 0
    %p164 = por %p162, %p163
    %p165 = scmp.ne.s32.totalorder %s153, %s154
    %p166 = scmp.eq.s32.totalorder %s18, 1
    %p167 = por %p165, %p166
    %p169 = scmp.ne.s32.totalorder %s154, %s168
    %p170 = scmp.eq.s32.totalorder %s18, 0
    %p171 = por %p169, %p170
    %s172 = ssub.s32 %s19, %s31
    %s173 = ssub.s32 %s20, %s27
    %s174 = sor.u32 %s172, %s173
    %p175 = scmp.eq.s32.totalorder %s174, 0
    %s177 = sadd.s32 %s176, 1
    %s178 = scalar_select %p175, %s176, %s177
    %p181 = pneg %p175
    %p182 = scmp.eq.s32.totalorder %s12, 1
    %p183 = por %p181, %p182
    %p184 = scmp.ne.s32.totalorder %s176, %s179
    %p185 = scmp.eq.s32.totalorder %s12, 0
    %p186 = por %p184, %p185
    %p187 = scmp.ne.s32.totalorder %s176, %s179
    %p188 = scmp.eq.s32.totalorder %s17, 1
    %p189 = por %p187, %p188
    %p190 = scmp.ne.s32.totalorder %s179, %s180
    %p191 = scmp.eq.s32.totalorder %s17, 0
    %p192 = por %p190, %p191
    %p193 = scmp.ne.s32.totalorder %s179, %s180
    %p194 = scmp.eq.s32.totalorder %s18, 1
    %p195 = por %p193, %p194
    %p197 = scmp.ne.s32.totalorder %s180, %s196
    %p198 = scmp.eq.s32.totalorder %s18, 0
    %p199 = por %p197, %p198
    %p200 = scmp.le.s32.totalorder 1, %s12
    %p201 = scmp.lt.s32.totalorder %s12, 3
    %p202 = pnand %p200, %p201
    %p203 = pneg %p202
    // Predicated region
    $region9: #{tpu_custom_call.1} parent=5 // pred_check
      _
    $region10: #{tpu_custom_call.1} parent=5 // pred_check_branch
      %205 = sbr.rel (%p202) target = $region12
    $region11: #{tpu_custom_call.1} parent=5 // pred_region
      %s206 = ssub.s32 %s12, 1
      // Predicated region
      $region13: #{tpu_custom_call.1} parent=11 // pred_check
        %p207 = pneg %p101
      $region14: #{tpu_custom_call.1} parent=11 // pred_check_branch
        %209 = sbr.rel (%p207) target = $region16
      $region15: #{tpu_custom_call.1} parent=11 // pred_region
        _
      $region16: #{tpu_custom_call.1} parent=11 // pred_fallthru
        _
      // Predicated region
      $region17: #{tpu_custom_call.1} parent=11 // pred_check
        %p210 = pneg %p122
      $region18: #{tpu_custom_call.1} parent=11 // pred_check_branch
        %212 = sbr.rel (%p210) target = $region20
      $region19: #{tpu_custom_call.1} parent=11 // pred_region
        _
      $region20: #{tpu_custom_call.1} parent=11 // pred_fallthru
        _
      // Predicated region
      $region21: #{tpu_custom_call.1} parent=11 // pred_check
        %p213 = pneg %p143
      $region22: #{tpu_custom_call.1} parent=11 // pred_check_branch
        %215 = sbr.rel (%p213) target = $region24
      $region23: #{tpu_custom_call.1} parent=11 // pred_region
        _
      $region24: #{tpu_custom_call.1} parent=11 // pred_fallthru
        _
      // Predicated region
      $region25: #{tpu_custom_call.1} parent=11 // pred_check
        %p216 = pneg %p164
      $region26: #{tpu_custom_call.1} parent=11 // pred_check_branch
        %218 = sbr.rel (%p216) target = $region28
      $region27: #{tpu_custom_call.1} parent=11 // pred_region
        _
      $region28: #{tpu_custom_call.1} parent=11 // pred_fallthru
        _
    $region12: #{tpu_custom_call.1} parent=5 // pred_fallthru
      _
    %p219 = scmp.lt.s32.totalorder %s12, 2
    // Predicated region
    $region29: #{tpu_custom_call.1} parent=5 // pred_check
      %p220 = pneg %p219
    $region30: #{tpu_custom_call.1} parent=5 // pred_check_branch
      %222 = sbr.rel (%p220) target = $region32
    $region31: #{tpu_custom_call.1} parent=5 // pred_region
      // Predicated region
      $region33: #{tpu_custom_call.1} parent=31 // pred_check
        %p223 = pneg %p46
      $region34: #{tpu_custom_call.1} parent=31 // pred_check_branch
        %225 = sbr.rel (%p223) target = $region36
      $region35: #{tpu_custom_call.1} parent=31 // pred_region
        %s226 = smul.u32 2, %s20
        %p227 = scmp.lt.s32.totalorder %s19, 1
        %s228 = scalar_select %p227, %s19, 1
        %p229 = scmp.lt.s32.totalorder %s226, 1
        %s230 = scalar_select %p229, %s226, 1
        %s231 = smul.addr %s228, 2
        %s232 = sadd.s32 %s230, %s231
        %s233 = smul.addr %s232, 4
        %s234 = scalar_lea.vmem %s0, %s233
        %s235 = smul.u32 2, %s20
      $region36: #{tpu_custom_call.1} parent=31 // pred_fallthru
        _
      // Predicated region
      $region37: #{tpu_custom_call.1} parent=31 // pred_check
        %p236 = pneg %p74
      $region38: #{tpu_custom_call.1} parent=31 // pred_check_branch
        %238 = sbr.rel (%p236) target = $region40
      $region39: #{tpu_custom_call.1} parent=31 // pred_region
        %s239 = smul.u32 2, %s20
        %p240 = scmp.lt.s32.totalorder %s19, 1
        %s241 = scalar_select %p240, %s19, 1
        %p242 = scmp.lt.s32.totalorder %s239, 1
        %s243 = scalar_select %p242, %s239, 1
        %s244 = smul.addr %s241, 2
        %s245 = sadd.s32 %s243, %s244
        %s246 = smul.addr %s245, 8
        %s247 = scalar_lea.vmem %s1, %s246
        %s248 = smul.u32 2, %s20
      $region40: #{tpu_custom_call.1} parent=31 // pred_fallthru
        _
    $region32: #{tpu_custom_call.1} parent=5 // pred_fallthru
      _
    %p249 = scmp.le.s32.totalorder 1, %s12
    %p250 = scmp.lt.s32.totalorder %s12, 3
    %p251 = pnand %p249, %p250
    %p252 = pneg %p251
    // Predicated region
    $region41: #{tpu_custom_call.1} parent=5 // pred_check
      _
    $region42: #{tpu_custom_call.1} parent=5 // pred_check_branch
      %254 = sbr.rel (%p251) target = $region44
    $region43: #{tpu_custom_call.1} parent=5 // pred_region
      %s255 = ssub.s32 %s12, 1
      %s256 = smul.u32 2, %s22
      %p257 = scmp.lt.s32.totalorder %s21, 1
      %s258 = scalar_select %p257, %s21, 1
      %p259 = scmp.lt.s32.totalorder %s256, 1
      %s260 = scalar_select %p259, %s256, 1
      %s261 = smul.addr %s258, 2
      %s262 = sadd.s32 %s260, %s261
      %s263 = smul.addr %s262, 4
      %s264 = scalar_lea.vmem %s0, %s263
      %p265 = pneg %p52
      %p266 = pneg %p49
      %s267 = smul.u32 2, %s22
      %p268 = scmp.lt.s32.totalorder %s21, 1
      %s269 = scalar_select %p268, %s21, 1
      %p270 = scmp.lt.s32.totalorder %s267, 1
      %s271 = scalar_select %p270, %s267, 1
      %s272 = smul.addr %s269, 2
      %s273 = sadd.s32 %s271, %s272
      %s274 = smul.addr %s273, 8
      %s275 = scalar_lea.vmem %s1, %s274
      %p276 = pneg %p80
      %p277 = pneg %p77
      %p278 = pneg %p101
      %p279 = pneg %p98
      %p280 = pneg %p122
      %p281 = pneg %p119
      %p282 = pneg %p143
      %p283 = pneg %p140
      %p284 = pneg %p164
      %p285 = pneg %p161
      %p286 = pneg %p192
      %p287 = pneg %p189
      %s288 = smul.u32 2, %s22
      %p289 = scmp.lt.s32.totalorder %s21, 1
      %s290 = scalar_select %p289, %s21, 1
      %p291 = scmp.lt.s32.totalorder %s288, 1
      %s292 = scalar_select %p291, %s288, 1
      %s293 = smul.addr %s290, 6
      %s294 = sadd.s32 %s292, %s293
      %s295 = smul.addr %s294, 8
      %s296 = scalar_lea.vmem %s6, %s295
      %s297 = smul.u32 2, %s22
      %p298 = scmp.lt.s32.totalorder %s21, 1
      %s299 = scalar_select %p298, %s21, 1
      %p300 = scmp.lt.s32.totalorder %s297, 1
      %s301 = scalar_select %p300, %s297, 1
      %s302 = smul.addr %s299, 2
      %s303 = sadd.s32 %s301, %s302
      %s304 = smul.addr %s303, 4
      %s305 = scalar_lea.vmem %s0, %s304
      %s306 = smul.u32 2, %s22
      %s307 = smul.u32 2, %s22
      %p308 = scmp.lt.s32.totalorder %s21, 1
      %s309 = scalar_select %p308, %s21, 1
      %p310 = scmp.lt.s32.totalorder %s307, 1
      %s311 = scalar_select %p310, %s307, 1
      %s312 = smul.addr %s309, 2
      %s313 = sadd.s32 %s311, %s312
      %s314 = smul.addr %s313, 8
      %s315 = scalar_lea.vmem %s1, %s314
      %s316 = smul.u32 2, %s22
      %s317 = smul.u32 2, %s22
      %p318 = scmp.lt.s32.totalorder %s21, 1
      %s319 = scalar_select %p318, %s21, 1
      %p320 = scmp.lt.s32.totalorder %s317, 1
      %s321 = scalar_select %p320, %s317, 1
      %s322 = smul.addr %s319, 6
      %s323 = sadd.s32 %s321, %s322
      %s324 = smul.addr %s323, 8
      %s325 = scalar_lea.vmem %s6, %s324
      %s326 = smul.u32 2, %s22
      %v327 = vld [vmem:[%s2] sm:$0xff]
      %v328 = vld [vmem:[%s305] sm:$0xff]
      %v329 = vld [vmem:[%s4] sm:$0xff]
      %331 = vset.pattern.permute.xlu0 0
      %332 = vperm.xlu0 %331, %v329
      %v333 = vpop.permute.xlu0 %332
      %v336 = vcombine.high %v328, %v328
      %vm337 = vcmask 31744
      %v339 = vsel %vm337, %v327, 0
      %vm341 = vcmask 1043456
      %v342 = vsel %vm341, %v328, 0
      %v344 = vsel %vm341, %v336, 0
      %346 = vmatprep.subr.mxu0 %v344
      %347 = vmatpush1.msra.mxu0 %v342
      %348 = vmatprep.subr.mxu0 0.0
      %349 = vmatpush1.msra.mxu0 0.0
      %350 = vmatprep.subr.mxu0 0.0
      %351 = vmatpush1.msra.mxu0 0.0
      %352 = vmatprep.subr.mxu0 0.0
      %353 = vmatpush1.msra.mxu0 0.0
      %354 = vmatprep.subr.mxu0 0.0
      %355 = vmatpush1.msra.mxu0 0.0
      %356 = vmatprep.subr.mxu0 0.0
      %357 = vmatpush1.msra.mxu0 0.0
      %358 = vmatprep.subr.mxu0 0.0
      %359 = vmatpush1.msra.mxu0 0.0
      %360 = vmatprep.subr.mxu0 0.0
      %361 = vmatpush1.msra.mxu0 0.0
      %362 = vmatprep.subr.mxu0 0.0
      %363 = vmatpush1.msra.mxu0 0.0
      %364 = vmatprep.subr.mxu0 0.0
      %365 = vmatpush1.msra.mxu0 0.0
      %366 = vmatprep.subr.mxu0 0.0
      %367 = vmatpush1.msra.mxu0 0.0
      %368 = vmatprep.subr.mxu0 0.0
      %369 = vmatpush1.msra.mxu0 0.0
      %370 = vmatprep.subr.mxu0 0.0
      %371 = vmatpush1.msra.mxu0 0.0
      %372 = vmatprep.subr.mxu0 0.0
      %373 = vmatpush1.msra.mxu0 0.0
      %374 = vmatprep.subr.mxu0 0.0
      %375 = vmatpush1.msra.mxu0 0.0
      %376 = vmatprep.subr.mxu0 0.0
      %377 = vmatpush1.msra.mxu0 0.0
      %378 = vmatprep.subr.mxu0 0.0
      %379 = vmatpush1.msra.mxu0 0.0
      %380 = vmatprep.subr.mxu0 0.0
      %381 = vmatpush1.msra.mxu0 0.0
      %382 = vmatprep.subr.mxu0 0.0
      %383 = vmatpush1.msra.mxu0 0.0
      %384 = vmatprep.subr.mxu0 0.0
      %385 = vmatpush1.msra.mxu0 0.0
      %386 = vmatprep.subr.mxu0 0.0
      %387 = vmatpush1.msra.mxu0 0.0
      %388 = vmatprep.subr.mxu0 0.0
      %389 = vmatpush1.msra.mxu0 0.0
      %390 = vmatprep.subr.mxu0 0.0
      %391 = vmatpush1.msra.mxu0 0.0
      %392 = vmatprep.subr.mxu0 0.0
      %393 = vmatpush1.msra.mxu0 0.0
      %394 = vmatprep.subr.mxu0 0.0
      %395 = vmatpush1.msra.mxu0 0.0
      %396 = vmatprep.subr.mxu0 0.0
      %397 = vmatpush1.msra.mxu0 0.0
      %398 = vmatprep.subr.mxu0 0.0
      %399 = vmatpush1.msra.mxu0 0.0
      %400 = vmatprep.subr.mxu0 0.0
      %401 = vmatpush1.msra.mxu0 0.0
      %402 = vmatprep.subr.mxu0 0.0
      %403 = vmatpush1.msra.mxu0 0.0
      %404 = vmatprep.subr.mxu0 0.0
      %405 = vmatpush1.msra.mxu0 0.0
      %406 = vmatprep.subr.mxu0 0.0
      %407 = vmatpush1.msra.mxu0 0.0
      %408 = vmatprep.subr.mxu0 0.0
      %409 = vmatpush1.msra.mxu0 0.0
      %410 = vmatprep.mubr.f32.mxu0 0.0
      %411 = vmatmul.mubr.f32.gmra.mrb[0].mxu0 %v339
      %v412 = vpop.f32.mrb[0].mxu0
      %v413 = vadd.f32 %v333, %v412
      %v414 = vpop.f32.mrb[0].mxu0
      %v415 = vadd.f32 %v333, %v414
      %416 = vdwg.mxu0
      %417 = vst [vmem:[%s325] sm:$0xff] %v413
      %418 = vst [vmem:[%s325 + $0x8] sm:$0xff] %v415
      %v419 = vld [vmem:[%s3] sm:$0xff]
      %v420 = vld [vmem:[%s3 + $0x8] sm:$0xf]
      %v421 = vld [vmem:[%s315] sm:$0x3f]
      %v422 = vld [vmem:[%s315 + $0x8] sm:$0x3f]
      %v423 = vld [vmem:[%s5] sm:$0xff]
      %v424 = vld [vmem:[%s5 + $0x8] sm:$0xf]
      %426 = vset.pattern.permute.xlu0 0
      %427 = vperm.xlu0 %426, %v423
      %v428 = vpop.permute.xlu0 %427
      %431 = vset.pattern.permute.xlu0 0
      %432 = vperm.xlu0 %431, %v424
      %v433 = vpop.permute.xlu0 %432
      %vm435 = vcmask 48128
      %v437 = vsel %vm435, %v419, 0
      %v440 = vsel %vm435, %v420, 0
      %vm442 = vcmask 1045504
      %v444 = vsel %vm442, %v421, 0
      %v447 = vsel %vm442, %v422, 0
      %449 = vmatprep.subr.mxu0 %v447
      %450 = vmatpush1.msra.mxu0 %v444
      %451 = vmatprep.subr.mxu0 0.0
      %452 = vmatpush1.msra.mxu0 0.0
      %453 = vmatprep.subr.mxu0 0.0
      %454 = vmatpush1.msra.mxu0 0.0
      %455 = vmatprep.subr.mxu0 0.0
      %456 = vmatpush1.msra.mxu0 0.0
      %457 = vmatprep.subr.mxu0 0.0
      %458 = vmatpush1.msra.mxu0 0.0
      %459 = vmatprep.subr.mxu0 0.0
      %460 = vmatpush1.msra.mxu0 0.0
      %461 = vmatprep.subr.mxu0 0.0
      %462 = vmatpush1.msra.mxu0 0.0
      %463 = vmatprep.subr.mxu0 0.0
      %464 = vmatpush1.msra.mxu0 0.0
      %465 = vmatprep.subr.mxu0 0.0
      %466 = vmatpush1.msra.mxu0 0.0
      %467 = vmatprep.subr.mxu0 0.0
      %468 = vmatpush1.msra.mxu0 0.0
      %469 = vmatprep.subr.mxu0 0.0
      %470 = vmatpush1.msra.mxu0 0.0
      %471 = vmatprep.subr.mxu0 0.0
      %472 = vmatpush1.msra.mxu0 0.0
      %473 = vmatprep.subr.mxu0 0.0
      %474 = vmatpush1.msra.mxu0 0.0
      %475 = vmatprep.subr.mxu0 0.0
      %476 = vmatpush1.msra.mxu0 0.0
      %477 = vmatprep.subr.mxu0 0.0
      %478 = vmatpush1.msra.mxu0 0.0
      %479 = vmatprep.subr.mxu0 0.0
      %480 = vmatpush1.msra.mxu0 0.0
      %481 = vmatprep.subr.mxu0 0.0
      %482 = vmatpush1.msra.mxu0 0.0
      %483 = vmatprep.subr.mxu0 0.0
      %484 = vmatpush1.msra.mxu0 0.0
      %485 = vmatprep.subr.mxu0 0.0
      %486 = vmatpush1.msra.mxu0 0.0
      %487 = vmatprep.subr.mxu0 0.0
      %488 = vmatpush1.msra.mxu0 0.0
      %489 = vmatprep.subr.mxu0 0.0
      %490 = vmatpush1.msra.mxu0 0.0
      %491 = vmatprep.subr.mxu0 0.0
      %492 = vmatpush1.msra.mxu0 0.0
      %493 = vmatprep.subr.mxu0 0.0
      %494 = vmatpush1.msra.mxu0 0.0
      %495 = vmatprep.subr.mxu0 0.0
      %496 = vmatpush1.msra.mxu0 0.0
      %497 = vmatprep.subr.mxu0 0.0
      %498 = vmatpush1.msra.mxu0 0.0
      %499 = vmatprep.subr.mxu0 0.0
      %500 = vmatpush1.msra.mxu0 0.0
      %501 = vmatprep.subr.mxu0 0.0
      %502 = vmatpush1.msra.mxu0 0.0
      %503 = vmatprep.subr.mxu0 0.0
      %504 = vmatpush1.msra.mxu0 0.0
      %505 = vmatprep.subr.mxu0 0.0
      %506 = vmatpush1.msra.mxu0 0.0
      %507 = vmatprep.subr.mxu0 0.0
      %508 = vmatpush1.msra.mxu0 0.0
      %509 = vmatprep.subr.mxu0 0.0
      %510 = vmatpush1.msra.mxu0 0.0
      %511 = vmatprep.subr.mxu0 0.0
      %512 = vmatpush1.msra.mxu0 0.0
      %513 = vmatprep.mubr.f32.mxu0 0.0
      %514 = vmatmul.mubr.f32.gmra.mrb[0].mxu0 %v437
      %v515 = vpop.f32.mrb[0].mxu0
      %v516 = vadd.f32 %v428, %v515
      %v517 = vpop.f32.mrb[0].mxu0
      %v518 = vadd.f32 %v428, %v517
      %519 = vmatprep.mubr.f32.mxu0 0.0
      %520 = vmatmul.mubr.f32.gmra.mrb[0].mxu0 %v440
      %v521 = vpop.f32.mrb[0].mxu0
      %v522 = vadd.f32 %v433, %v521
      %v523 = vpop.f32.mrb[0].mxu0
      %v524 = vadd.f32 %v433, %v523
      %525 = vdwg.mxu0
      %526 = vst [vmem:[%s325 + $0x10] sm:$0xff] %v516
      %527 = vst [vmem:[%s325 + $0x18] sm:$0xff] %v518
      %528 = vst [vmem:[%s325 + $0x20] sm:$0xf] %v522
      %529 = vst [vmem:[%s325 + $0x28] sm:$0xf] %v524
      %s530 = smul.u32 2, %s22
      %p531 = scmp.lt.s32.totalorder %s21, 1
      %s532 = scalar_select %p531, %s21, 1
      %p533 = scmp.lt.s32.totalorder %s530, 1
      %s534 = scalar_select %p533, %s530, 1
      %s535 = smul.addr %s532, 6
      %s536 = sadd.s32 %s534, %s535
      %s537 = smul.addr %s536, 8
      %s538 = scalar_lea.vmem %s6, %s537
      // Predicated region
      $region45: #{tpu_custom_call.1} parent=43 // pred_check
        %p539 = pneg %p189
      $region46: #{tpu_custom_call.1} parent=43 // pred_check_branch
        %541 = sbr.rel (%p539) target = $region48
      $region47: #{tpu_custom_call.1} parent=43 // pred_region
        %s542 = smul.u32 2, %s22
      $region48: #{tpu_custom_call.1} parent=43 // pred_fallthru
        _
    $region44: #{tpu_custom_call.1} parent=5 // pred_fallthru
      _
    %p543 = scmp.le.s32.totalorder 2, %s12
    // Predicated region
    $region49: #{tpu_custom_call.1} parent=5 // pred_check
      %p544 = pneg %p543
    $region50: #{tpu_custom_call.1} parent=5 // pred_check_branch
      %546 = sbr.rel (%p544) target = $region52
    $region51: #{tpu_custom_call.1} parent=5 // pred_region
      %s547 = ssub.s32 %s12, 2
      // Predicated region
      $region53: #{tpu_custom_call.1} parent=51 // pred_check
        %p548 = pneg %p195
      $region54: #{tpu_custom_call.1} parent=51 // pred_check_branch
        %550 = sbr.rel (%p548) target = $region56
      $region55: #{tpu_custom_call.1} parent=51 // pred_region
        %s551 = smul.u32 2, %s24
        %p552 = scmp.lt.s32.totalorder %s23, 1
        %s553 = scalar_select %p552, %s23, 1
        %p554 = scmp.lt.s32.totalorder %s551, 1
        %s555 = scalar_select %p554, %s551, 1
        %s556 = smul.addr %s553, 6
        %s557 = sadd.s32 %s555, %s556
        %s558 = smul.addr %s557, 8
        %s559 = scalar_lea.vmem %s6, %s558
      $region56: #{tpu_custom_call.1} parent=51 // pred_fallthru
        _
    $region52: #{tpu_custom_call.1} parent=5 // pred_fallthru
      _
  $region6: #{tpu_custom_call.1} parent=0 // loop_footer
    %s16 = sadd.s32 1, %s12
  $region7: #{tpu_custom_call.1} parent=0 // loop_footer_branch
    %11 = sbr.rel target = $region3
  $region8: #{tpu_custom_call.1} parent=0 // loop_exit
    _

</llo_original>
